<compile_context>
chip_gen: v7x
topology: tpu7x:2x2x1
jax: 0.10.0
libtpu: 0.0.40
codegen_flags: <defaults>
</compile_context>

<pallas_src>
import functools

import jax
import jax.numpy as jnp
from jax.experimental import pallas as pl
from jax.experimental.pallas import tpu as pltpu


# ----------------------------------------------------------------------------
# Kernels
# ----------------------------------------------------------------------------
def _mean_kernel(x_ref, o_ref, acc_ref, *, inv_len):
    # x_ref: (TB, TL, D)   o_ref: (TB, D)   acc_ref: (TB, D) f32 scratch
    k = pl.program_id(1)

    @pl.when(k == 0)
    def _():
        acc_ref[...] = jnp.zeros_like(acc_ref)

    # Accumulate in f32 regardless of input dtype (bf16-safe).
    acc_ref[...] += jnp.sum(x_ref[...].astype(jnp.float32), axis=1)

    @pl.when(k == pl.num_programs(1) - 1)
    def _():
        o_ref[...] = (acc_ref[...] * inv_len).astype(o_ref.dtype)


def _masked_sum_kernel(x_ref, m_ref, o_ref, acc_ref):
    # x_ref: (TB, TL, D)   m_ref: (TB, 1, TL)   o_ref: (TB, D)
    # acc_ref: (TB, D) f32 scratch
    k = pl.program_id(1)

    @pl.when(k == 0)
    def _():
        acc_ref[...] = jnp.zeros_like(acc_ref)

    x = x_ref[...]                      # (TB, TL, D)
    m = m_ref[...].astype(x.dtype)      # (TB, 1, TL), lane-dense along L

    # Broadcast-and-reduce on the MXU: per-batch (1, TL) @ (TL, D) -> (1, D),
    # with free f32 accumulation.
    part = jnp.einsum(
        "bql,bld->bqd", m, x, preferred_element_type=jnp.float32
    )                                    # (TB, 1, D) f32
    acc_ref[...] += part[:, 0, :]

    @pl.when(k == pl.num_programs(1) - 1)
    def _():
        o_ref[...] = acc_ref[...].astype(o_ref.dtype)


# ----------------------------------------------------------------------------
# Tile-size selection (VMEM-budget aware, valid on v5e / v6e / v7x defaults)
# ----------------------------------------------------------------------------
def _pick_batch_tile(B: int) -> int:
    """Batch rows per grid step. Must divide B and be a multiple of 8 or == B
    (output block second-to-last-dim constraint)."""
    if B <= 8:
        return B
    for tb in (64, 32, 16, 8):
        if B % tb == 0:
            return tb
    return B  # odd batch size: a single block over the whole batch axis


def _pick_seq_tile(L: int, D: int, itemsize: int, tb: int,
                   target_bytes: int = 2 << 20) -> int:
    """Sequence tile TL. Must divide L and be a multiple of 128 or == L
    (mask lane-dim / x sublane-dim constraints). Keeps the x block
    ~<= target_bytes so double buffering fits default scoped VMEM everywhere."""
    per_row = D * itemsize * tb
    if L * per_row <= target_bytes:
        return L
    max_tl = max(128, (target_bytes // max(1, per_row)) // 128 * 128)
    for tl in range(max_tl, 127, -128):
        if L % tl == 0:
            return tl
    return L  # no multiple-of-128 divisor of L: fall back to one full block


# ----------------------------------------------------------------------------
# Wrapper
# ----------------------------------------------------------------------------
def global_sum_1d(x, mask=None):
    """Pallas implementation of GlobalSum1D.forward.

    x: (B, L, D), mask: (B, L) (bool / int / float) or None. Returns (B, D).
    """
    B, L, D = x.shape
    itemsize = jnp.dtype(x.dtype).itemsize
    tb = _pick_batch_tile(B)
    tl = _pick_seq_tile(L, D, itemsize, tb)
    grid = (B // tb, L // tl)
    out_shape = jax.ShapeDtypeStruct((B, D), x.dtype)
    compiler_params = pltpu.CompilerParams(
        dimension_semantics=("parallel", "arbitrary"))

    if mask is None:
        return pl.pallas_call(
            functools.partial(_mean_kernel, inv_len=1.0 / L),
            out_shape=out_shape,
            grid_spec=pltpu.PrefetchScalarGridSpec(
                num_scalar_prefetch=0,
                grid=grid,
                in_specs=[pl.BlockSpec((tb, tl, D), lambda b, k: (b, k, 0))],
                out_specs=pl.BlockSpec((tb, D), lambda b, k: (b, 0)),
                scratch_shapes=[pltpu.VMEM((tb, D), jnp.float32)],
            ),
            compiler_params=compiler_params,
            cost_estimate=pl.CostEstimate(
                flops=B * L * D,
                transcendentals=0,
                bytes_accessed=B * L * D * itemsize + B * D * itemsize),
        )(x)

    # Keep the mask narrow on the wire: bool -> int8 (1 byte/elem, no f32
    # round trip). The float cast happens inside the kernel.
    if mask.dtype == jnp.bool_:
        mask = mask.astype(jnp.int8)
    m3 = mask[:, None, :]  # (B, 1, L): L sits on the lane axis (lane-dense)
    m_itemsize = jnp.dtype(m3.dtype).itemsize

    return pl.pallas_call(
        _masked_sum_kernel,
        out_shape=out_shape,
        grid_spec=pltpu.PrefetchScalarGridSpec(
            num_scalar_prefetch=0,
            grid=grid,
            in_specs=[
                pl.BlockSpec((tb, tl, D), lambda b, k: (b, k, 0)),
                pl.BlockSpec((tb, 1, tl), lambda b, k: (b, 0, k)),
            ],
            out_specs=pl.BlockSpec((tb, D), lambda b, k: (b, 0)),
            scratch_shapes=[pltpu.VMEM((tb, D), jnp.float32)],
        ),
        compiler_params=compiler_params,
        cost_estimate=pl.CostEstimate(
            flops=2 * B * L * D,
            transcendentals=0,
            bytes_accessed=(B * L * D * itemsize
                            + B * L * m_itemsize
                            + B * D * itemsize)),
    )(x, m3)


if __name__ == "__main__":
    # GlobalSum1D has no learnable parameters (dim=1 aggregator only).
    key = jax.random.PRNGKey(0)
    kx, km = jax.random.split(key)

    B, L, D = 2, 8, 32
    x = jax.random.normal(kx, (B, L, D), dtype=jnp.float32)
    mask = jax.random.uniform(km, (B, L)) > 0.3  # boolean mask, like torch

    # Masked branch: (x * mask.float()[..., None]).sum(dim=1)
    out_masked = global_sum_1d(x, mask)
    jax.block_until_ready(out_masked)
    ref_masked = jnp.sum(x * mask.astype(jnp.float32)[..., None], axis=1)
    assert out_masked.shape == (B, D)
    assert jnp.allclose(out_masked, ref_masked, atol=1e-5, rtol=1e-5)

    # No-mask branch: x.mean(dim=1)
    out_mean = global_sum_1d(x, None)
    jax.block_until_ready(out_mean)
    ref_mean = jnp.mean(x, axis=1)
    assert out_mean.shape == (B, D)
    assert jnp.allclose(out_mean, ref_mean, atol=1e-5, rtol=1e-5)

    print("KERNEL_OK")
</pallas_src>

<mosaic_0001>
module attributes {stable_mosaic.version = 11 : i64} {
  func.func @_masked_sum_kernel(%arg0: i32, %arg1: i32, %arg2: memref<2x8x32xf32, #tpu.memory_space<vmem>>, %arg3: memref<2x1x8xi8, #tpu.memory_space<vmem>>, %arg4: memref<2x32xf32, #tpu.memory_space<vmem>>, %arg5: memref<2x32xf32, #tpu.memory_space<vmem>>) attributes {dimension_semantics = [#tpu.dimension_semantics<parallel>, #tpu.dimension_semantics<arbitrary>], iteration_bounds = array<i64: 1, 1>, scalar_prefetch = 0 : i64, scratch_operands = 1 : i64, tpu.core_type = #tpu.core_type<tc>, window_params = [{transform_indices = @transform_0, window_bounds = array<i64: 2, 8, 32>}, {transform_indices = @transform_1, window_bounds = array<i64: 2, 1, 8>}, {transform_indices = @transform_2, window_bounds = array<i64: 2, 32>}]} {
    %c0_i32 = arith.constant 0 : i32
    %0 = arith.cmpi eq, %arg1, %c0_i32 : i32
    %1 = arith.extui %0 : i1 to i32
    %c0_i32_0 = arith.constant 0 : i32
    %2 = arith.cmpi ne, %1, %c0_i32_0 : i32
    scf.if %2 {
      %cst_12 = arith.constant 0.000000e+00 : f32
      %14 = vector.broadcast %cst_12 : f32 to vector<2x32xf32>
      %c0_13 = arith.constant 0 : index
      %c0_14 = arith.constant 0 : index
      %15 = vector.load %arg5[%c0_13, %c0_14] : memref<2x32xf32, #tpu.memory_space<vmem>>, vector<2x32xf32>
      tpu.vector_store %arg5[%c0_13, %c0_14], %14 {strides = array<i32>} : memref<2x32xf32, #tpu.memory_space<vmem>>, vector<2x32xf32>,
    } else {
    }
    %c0 = arith.constant 0 : index
    %c0_1 = arith.constant 0 : index
    %c0_2 = arith.constant 0 : index
    %3 = vector.load %arg2[%c0, %c0_1, %c0_2] : memref<2x8x32xf32, #tpu.memory_space<vmem>>, vector<2x8x32xf32>
    %c0_3 = arith.constant 0 : index
    %c0_4 = arith.constant 0 : index
    %c0_5 = arith.constant 0 : index
    %4 = vector.load %arg3[%c0_3, %c0_4, %c0_5] : memref<2x1x8xi8, #tpu.memory_space<vmem>>, vector<2x1x8xi8>
    %5 = arith.sitofp %4 : vector<2x1x8xi8> to vector<2x1x8xf32>
    "tpu.trace_start"() <{level = 10 : i32, message = "bql,bld->bqd"}> : () -> ()
    %cst = arith.constant dense<0.000000e+00> : vector<2x1x32xf32>
    %6 = tpu.matmul %5, %3, %cst {dimension_numbers = #tpu.dot_dimension_numbers<[2], [1], [1], [2], [0, 0, 0, 1, 1, 2], [0], [0]>} : vector<2x1x8xf32>, vector<2x8x32xf32>, vector<2x1x32xf32> -> vector<2x1x32xf32>
    "tpu.trace_stop"() : () -> ()
    %c0_6 = arith.constant 0 : index
    %c0_7 = arith.constant 0 : index
    %7 = vector.load %arg5[%c0_6, %c0_7] : memref<2x32xf32, #tpu.memory_space<vmem>>, vector<2x32xf32>
    %8 = vector.shape_cast %6 : vector<2x1x32xf32> to vector<2x32xf32>
    %9 = arith.addf %7, %8 : vector<2x32xf32>
    %c0_8 = arith.constant 0 : index
    %c0_9 = arith.constant 0 : index
    %10 = vector.load %arg5[%c0_8, %c0_9] : memref<2x32xf32, #tpu.memory_space<vmem>>, vector<2x32xf32>
    tpu.vector_store %arg5[%c0_8, %c0_9], %9 {strides = array<i32>} : memref<2x32xf32, #tpu.memory_space<vmem>>, vector<2x32xf32>,
    %c0_i32_10 = arith.constant 0 : i32
    %11 = arith.cmpi eq, %arg1, %c0_i32_10 : i32
    %12 = arith.extui %11 : i1 to i32
    %c0_i32_11 = arith.constant 0 : i32
    %13 = arith.cmpi ne, %12, %c0_i32_11 : i32
    scf.if %13 {
      %c0_12 = arith.constant 0 : index
      %c0_13 = arith.constant 0 : index
      %14 = vector.load %arg5[%c0_12, %c0_13] : memref<2x32xf32, #tpu.memory_space<vmem>>, vector<2x32xf32>
      %c0_14 = arith.constant 0 : index
      %c0_15 = arith.constant 0 : index
      %15 = vector.load %arg4[%c0_14, %c0_15] : memref<2x32xf32, #tpu.memory_space<vmem>>, vector<2x32xf32>
      tpu.vector_store %arg4[%c0_14, %c0_15], %14 {strides = array<i32>} : memref<2x32xf32, #tpu.memory_space<vmem>>, vector<2x32xf32>,
    } else {
    }
    return
  }
  func.func @transform_0(%arg0: i32, %arg1: i32) -> (i32, i32, i32) {
    %c0_i32 = arith.constant 0 : i32
    %c0_i32_0 = arith.constant 0 : i32
    return %arg0, %arg1, %c0_i32 : i32, i32, i32
  }
  func.func @transform_1(%arg0: i32, %arg1: i32) -> (i32, i32, i32) {
    %c0_i32 = arith.constant 0 : i32
    %c0_i32_0 = arith.constant 0 : i32
    return %arg0, %c0_i32, %arg1 : i32, i32, i32
  }
  func.func @transform_2(%arg0: i32, %arg1: i32) -> (i32, i32) {
    %c0_i32 = arith.constant 0 : i32
    %c0_i32_0 = arith.constant 0 : i32
    return %arg0, %c0_i32 : i32, i32
  }
}

</mosaic_0001>

<llo_original>
// kernel: tpu_custom_call.1
$region0: #{tpu_custom_call.1}
  #allocation0 [shape = 'u32[]', space=smem, size = 0x4, offset = 0x4, fixed_abs, tag = 'smem constant byte address 0x4 - core index']
  #allocation1 [shape = 'u32[144,128]{1,0:T(1,128)}', space=vmem, size = 0x12000, scoped, tag = 'internal scratch']
  #allocation2 [shape = 'f32[2,32]{1,0:T(2,128)}', space=vmem, size = 0x400, scoped, tag = 'scratch operand']
  %s0 = inlined_call_operand.hbm [shape: f32[2,8,32], index: 0, kind: input, shape index: {}]
  %s1 = inlined_call_operand.vmem [shape: s8[2,1,8], index: 1, kind: input, shape index: {}]
  %s2 = inlined_call_operand.hbm [shape: f32[2,32], index: 2, kind: output, shape index: {}]
  %s3 = sld [smem:[#allocation0]]
  $region30: #{tpu_custom_call.1} parent=0
    _
  %s5 = ssub.s32 1, %s3
  %s6 = scalar_select 0, %s5, %s3
  $region1: #{tpu_custom_call.1} parent=0
    #allocation3 [shape = 'u8[8192]{0}', space=vmem, size = 0x2000, scoped, tag = 'input window, operand 0, single buffered']
    #allocation4 [shape = 's32[1]{0}', space=sflag, size = 0x4, scoped, tag = 'scoped memory for tpu_custom_call.1']
    #allocation5 [shape = 's32[1]{0}', space=sflag, size = 0x4, scoped, tag = 'scoped memory for tpu_custom_call.1']
    #allocation6 [shape = 'u8[1024]{0}', space=vmem, size = 0x400, scoped, tag = 'output window, operand 0, single buffered']
    %7 = vsyncpa [#allocation4], 0
    %8 = vsyncpa [#allocation5], 0
    // Predicated region
    $region2: #{tpu_custom_call.1} parent=1 // pred_check
      _
    $region3: #{tpu_custom_call.1} parent=1 // pred_check_branch
      %10 = sbr.rel (0) target = $region5
    $region4: #{tpu_custom_call.1} parent=1 // pred_region
      %s12 = ssub.s32 256, 256
      %13 = vsyncadd [#allocation4], %s12
      %s14 = sshll.u32 [#allocation3], 4
      %s15 = int_to_ptr.vmem [resolvable:$true] %s14
      %20 = dma.hbm_to_vmem [thread:$0]  %s0, 256, %s15, [#allocation4], 128, 128, 8
    $region5: #{tpu_custom_call.1} parent=1 // pred_fallthru
      _
    // Predicated region
    $region6: #{tpu_custom_call.1} parent=1 // pred_check
      _
    $region7: #{tpu_custom_call.1} parent=1 // pred_check_branch
      %22 = sbr.rel (0) target = $region9
    $region8: #{tpu_custom_call.1} parent=1 // pred_region
      _
    $region9: #{tpu_custom_call.1} parent=1 // pred_fallthru
      _
    // Predicated region
    $region10: #{tpu_custom_call.1} parent=1 // pred_check
      _
    $region11: #{tpu_custom_call.1} parent=1 // pred_check_branch
      %24 = sbr.rel (0) target = $region13
    $region12: #{tpu_custom_call.1} parent=1 // pred_region
      %25 = dma.done [#allocation4], 256
    $region13: #{tpu_custom_call.1} parent=1 // pred_fallthru
      _
    %p26 = scmp.eq.s32.totalorder 0, 0
    // Predicated region
    $region14: #{tpu_custom_call.1} parent=1 // pred_check
      %p27 = pneg %p26
    $region15: #{tpu_custom_call.1} parent=1 // pred_check_branch
      %29 = sbr.rel (%p27) target = $region17
    $region16: #{tpu_custom_call.1} parent=1 // pred_region
      %vm30 = vcmask 254976
      %31 = vst.msk [vmem:[#allocation2] sm:$0x3] %vm30, 0.0
    $region17: #{tpu_custom_call.1} parent=1 // pred_fallthru
      _
    %v32 = vld [vmem:[#allocation3] sm:$0xff]
    %v33 = vld [vmem:[#allocation3 + $0x8] sm:$0xff]
    %v34 = vld [vmem:[%s1] sm:$0x1]
    %v35 = vld [vmem:[%s1 + $0x1] sm:$0x1]
    %v36 = vunpack.c.0.s8 %v34
    %v37 = vunpack.c.0.s8 %v35
    %v38 = vcvt.s32.f32 %v36
    %v39 = vcvt.s32.f32 %v37
    %vm40 = vcmask 64512
    %v42 = vsel %vm40, %v38, 0
    %44 = vmatprep.subr.mxu0 0.0
    %45 = vmatpush1.msra.mxu0 %v32
    %46 = vmatprep.subr.mxu0 0.0
    %47 = vmatpush1.msra.mxu0 0.0
    %48 = vmatprep.subr.mxu0 0.0
    %49 = vmatpush1.msra.mxu0 0.0
    %50 = vmatprep.subr.mxu0 0.0
    %51 = vmatpush1.msra.mxu0 0.0
    %52 = vmatprep.subr.mxu0 0.0
    %53 = vmatpush1.msra.mxu0 0.0
    %54 = vmatprep.subr.mxu0 0.0
    %55 = vmatpush1.msra.mxu0 0.0
    %56 = vmatprep.subr.mxu0 0.0
    %57 = vmatpush1.msra.mxu0 0.0
    %58 = vmatprep.subr.mxu0 0.0
    %59 = vmatpush1.msra.mxu0 0.0
    %60 = vmatprep.subr.mxu0 0.0
    %61 = vmatpush1.msra.mxu0 0.0
    %62 = vmatprep.subr.mxu0 0.0
    %63 = vmatpush1.msra.mxu0 0.0
    %64 = vmatprep.subr.mxu0 0.0
    %65 = vmatpush1.msra.mxu0 0.0
    %66 = vmatprep.subr.mxu0 0.0
    %67 = vmatpush1.msra.mxu0 0.0
    %68 = vmatprep.subr.mxu0 0.0
    %69 = vmatpush1.msra.mxu0 0.0
    %70 = vmatprep.subr.mxu0 0.0
    %71 = vmatpush1.msra.mxu0 0.0
    %72 = vmatprep.subr.mxu0 0.0
    %73 = vmatpush1.msra.mxu0 0.0
    %74 = vmatprep.subr.mxu0 0.0
    %75 = vmatpush1.msra.mxu0 0.0
    %76 = vmatprep.subr.mxu0 0.0
    %77 = vmatpush1.msra.mxu0 0.0
    %78 = vmatprep.subr.mxu0 0.0
    %79 = vmatpush1.msra.mxu0 0.0
    %80 = vmatprep.subr.mxu0 0.0
    %81 = vmatpush1.msra.mxu0 0.0
    %82 = vmatprep.subr.mxu0 0.0
    %83 = vmatpush1.msra.mxu0 0.0
    %84 = vmatprep.subr.mxu0 0.0
    %85 = vmatpush1.msra.mxu0 0.0
    %86 = vmatprep.subr.mxu0 0.0
    %87 = vmatpush1.msra.mxu0 0.0
    %88 = vmatprep.subr.mxu0 0.0
    %89 = vmatpush1.msra.mxu0 0.0
    %90 = vmatprep.subr.mxu0 0.0
    %91 = vmatpush1.msra.mxu0 0.0
    %92 = vmatprep.subr.mxu0 0.0
    %93 = vmatpush1.msra.mxu0 0.0
    %94 = vmatprep.subr.mxu0 0.0
    %95 = vmatpush1.msra.mxu0 0.0
    %96 = vmatprep.subr.mxu0 0.0
    %97 = vmatpush1.msra.mxu0 0.0
    %98 = vmatprep.subr.mxu0 0.0
    %99 = vmatpush1.msra.mxu0 0.0
    %100 = vmatprep.subr.mxu0 0.0
    %101 = vmatpush1.msra.mxu0 0.0
    %102 = vmatprep.subr.mxu0 0.0
    %103 = vmatpush1.msra.mxu0 0.0
    %104 = vmatprep.subr.mxu0 0.0
    %105 = vmatpush1.msra.mxu0 0.0
    %106 = vmatprep.subr.mxu0 0.0
    %107 = vmatpush1.msra.mxu0 0.0
    %108 = vmatprep.mubr.f32.mxu0 0.0
    %109 = vmatmul.mubr.f32.gmra.mrb[0].mxu0 %v42
    %v110 = vpop.f32.mrb[0].mxu0
    %v111 = vadd.f32 0.0, %v110
    %v112 = vpop.f32.mrb[0].mxu0
    %113 = vdwg.mxu0
    %v115 = vsel %vm40, %v39, 0
    %117 = vmatprep.subr.mxu0 0.0
    %118 = vmatpush1.msra.mxu0 %v33
    %119 = vmatprep.subr.mxu0 0.0
    %120 = vmatpush1.msra.mxu0 0.0
    %121 = vmatprep.subr.mxu0 0.0
    %122 = vmatpush1.msra.mxu0 0.0
    %123 = vmatprep.subr.mxu0 0.0
    %124 = vmatpush1.msra.mxu0 0.0
    %125 = vmatprep.subr.mxu0 0.0
    %126 = vmatpush1.msra.mxu0 0.0
    %127 = vmatprep.subr.mxu0 0.0
    %128 = vmatpush1.msra.mxu0 0.0
    %129 = vmatprep.subr.mxu0 0.0
    %130 = vmatpush1.msra.mxu0 0.0
    %131 = vmatprep.subr.mxu0 0.0
    %132 = vmatpush1.msra.mxu0 0.0
    %133 = vmatprep.subr.mxu0 0.0
    %134 = vmatpush1.msra.mxu0 0.0
    %135 = vmatprep.subr.mxu0 0.0
    %136 = vmatpush1.msra.mxu0 0.0
    %137 = vmatprep.subr.mxu0 0.0
    %138 = vmatpush1.msra.mxu0 0.0
    %139 = vmatprep.subr.mxu0 0.0
    %140 = vmatpush1.msra.mxu0 0.0
    %141 = vmatprep.subr.mxu0 0.0
    %142 = vmatpush1.msra.mxu0 0.0
    %143 = vmatprep.subr.mxu0 0.0
    %144 = vmatpush1.msra.mxu0 0.0
    %145 = vmatprep.subr.mxu0 0.0
    %146 = vmatpush1.msra.mxu0 0.0
    %147 = vmatprep.subr.mxu0 0.0
    %148 = vmatpush1.msra.mxu0 0.0
    %149 = vmatprep.subr.mxu0 0.0
    %150 = vmatpush1.msra.mxu0 0.0
    %151 = vmatprep.subr.mxu0 0.0
    %152 = vmatpush1.msra.mxu0 0.0
    %153 = vmatprep.subr.mxu0 0.0
    %154 = vmatpush1.msra.mxu0 0.0
    %155 = vmatprep.subr.mxu0 0.0
    %156 = vmatpush1.msra.mxu0 0.0
    %157 = vmatprep.subr.mxu0 0.0
    %158 = vmatpush1.msra.mxu0 0.0
    %159 = vmatprep.subr.mxu0 0.0
    %160 = vmatpush1.msra.mxu0 0.0
    %161 = vmatprep.subr.mxu0 0.0
    %162 = vmatpush1.msra.mxu0 0.0
    %163 = vmatprep.subr.mxu0 0.0
    %164 = vmatpush1.msra.mxu0 0.0
    %165 = vmatprep.subr.mxu0 0.0
    %166 = vmatpush1.msra.mxu0 0.0
    %167 = vmatprep.subr.mxu0 0.0
    %168 = vmatpush1.msra.mxu0 0.0
    %169 = vmatprep.subr.mxu0 0.0
    %170 = vmatpush1.msra.mxu0 0.0
    %171 = vmatprep.subr.mxu0 0.0
    %172 = vmatpush1.msra.mxu0 0.0
    %173 = vmatprep.subr.mxu0 0.0
    %174 = vmatpush1.msra.mxu0 0.0
    %175 = vmatprep.subr.mxu0 0.0
    %176 = vmatpush1.msra.mxu0 0.0
    %177 = vmatprep.subr.mxu0 0.0
    %178 = vmatpush1.msra.mxu0 0.0
    %179 = vmatprep.subr.mxu0 0.0
    %180 = vmatpush1.msra.mxu0 0.0
    %181 = vmatprep.mubr.f32.mxu0 0.0
    %182 = vmatmul.mubr.f32.gmra.mrb[0].mxu0 %v115
    %v183 = vpop.f32.mrb[0].mxu0
    %v184 = vadd.f32 0.0, %v183
    %v185 = vpop.f32.mrb[0].mxu0
    %186 = vdwg.mxu0
    %v187 = vld [vmem:[#allocation2] sm:$0x3]
    %v190 = vrot.slane %v184, 7
    %vm191 = vcmask 1041409
    %v192 = vsel %vm191, %v190, %v111
    %v194 = vadd.f32 %v187, %v192
    %vm195 = vcmask 254976
    %196 = vst.msk [vmem:[#allocation2] sm:$0x3] %vm195, %v194
    // Predicated region
    $region18: #{tpu_custom_call.1} parent=1 // pred_check
      %p197 = pneg %p26
    $region19: #{tpu_custom_call.1} parent=1 // pred_check_branch
      %199 = sbr.rel (%p197) target = $region21
    $region20: #{tpu_custom_call.1} parent=1 // pred_region
      %v200 = vld [vmem:[#allocation2] sm:$0x3]
      %201 = vst.msk [vmem:[#allocation6] sm:$0x3] %vm195, %v200
    $region21: #{tpu_custom_call.1} parent=1 // pred_fallthru
      _
    // Predicated region
    $region22: #{tpu_custom_call.1} parent=1 // pred_check
      _
    $region23: #{tpu_custom_call.1} parent=1 // pred_check_branch
      %203 = sbr.rel (0) target = $region25
    $region24: #{tpu_custom_call.1} parent=1 // pred_region
      %s205 = ssub.s32 32, 32
      %206 = vsyncadd [#allocation5], %s205
      %s208 = sshll.u32 [#allocation6], 4
      %s209 = int_to_ptr.vmem [resolvable:$true] %s208
      %211 = dma.vmem_to_hbm [thread:$0]  %s209, 32, %s2, [#allocation5]
    $region25: #{tpu_custom_call.1} parent=1 // pred_fallthru
      _
    // Predicated region
    $region26: #{tpu_custom_call.1} parent=1 // pred_check
      _
    $region27: #{tpu_custom_call.1} parent=1 // pred_check_branch
      %213 = sbr.rel (0) target = $region29
    $region28: #{tpu_custom_call.1} parent=1 // pred_region
      %214 = dma.done [#allocation5], 32
    $region29: #{tpu_custom_call.1} parent=1 // pred_fallthru
      _
    %215 = vsyncpa [#allocation4], 1
    %216 = vsyncpa [#allocation5], 1

</llo_original>
